<compile_context>
chip_gen: v6e
topology: v6e:2x2x1
jax: 0.10.0
libtpu: 0.0.40
codegen_flags: <defaults>
</compile_context>

<pallas_src>
import jax
import jax.numpy as jnp
import numpy as np
from jax.experimental import pallas as pl
from jax.experimental.pallas import tpu as pltpu

MAX_SPAN = 255


def _compute_relative_distance_matrix(query_length, key_length):
    """[query_length, key_length] relative distance matrix (int32, host)."""
    if (key_length - query_length) % 2:
        raise ValueError('Key_length should be query_length + 2 * memory_flange.')
    key_index = np.arange(key_length)
    query_index = np.arange(query_length) + (key_length - query_length) // 2
    distance_matrix = key_index[None, :] - query_index[:, None]
    distance_matrix = distance_matrix + MAX_SPAN - 1
    if query_length + (key_length - query_length) // 2 > MAX_SPAN:
        distance_matrix = np.clip(distance_matrix, 0, MAX_SPAN * 2 - 2)
    return np.asarray(distance_matrix, dtype=np.int32)


def _round_up(x, m):
    return ((x + m - 1) // m) * m


# -----------------------------------------------------------------------------
# Slice-gather kernel: table resident in VMEM, per-step block assembled in
# VMEM and written back via one pipelined output DMA.
# -----------------------------------------------------------------------------
def _make_gather_kernel(rows_per_step, k):
    unroll = rows_per_step if rows_per_step <= 8 else 8

    def kernel(starts_ref, emb_ref, out_ref):
        # starts_ref: SMEM (Q_pad,) int32  (scalar prefetch)
        # emb_ref   : VMEM (N_total, D)    (full table, fetched once)
        # out_ref   : VMEM (rows_per_step, K, D)
        base = pl.program_id(0) * rows_per_step

        def body(r, carry):
            start = starts_ref[base + r]
            out_ref[r] = emb_ref[pl.ds(start, k), :]
            return carry

        jax.lax.fori_loop(0, rows_per_step, body, 0, unroll=unroll)

    return kernel


def _slice_gather(table, starts, q, k, *, max_rows_per_step=64):
    """out[i] = table[starts[i] : starts[i] + k, :] for i in range(q)."""
    n_total, d = table.shape
    itemsize = jnp.dtype(table.dtype).itemsize
    out_row_bytes = k * d * itemsize
    table_bytes = n_total * d * itemsize

    # Fat steps for the 1-TC parts; >=2 steps (when Q allows) for v7x's 2 TCs.
    if q <= 8:
        rows_per_step = 8
    else:
        rows_per_step = min(max_rows_per_step, _round_up((q + 1) // 2, 8))
    # Keep 2x table (double-buffered input) + 2x output block under ~24 MiB
    # so we stay inside the 32 MiB scoped-VMEM default on all generations.
    budget = 24 * 1024 * 1024
    while rows_per_step > 8 and (2 * table_bytes + 2 * rows_per_step * out_row_bytes) > budget:
        rows_per_step -= 8

    grid = pl.cdiv(q, rows_per_step)
    q_pad = grid * rows_per_step
    starts_padded = np.zeros((q_pad,), dtype=np.int32)
    starts_padded[:q] = starts  # padded rows gather table[0:k] and are trimmed

    out = pl.pallas_call(
        _make_gather_kernel(rows_per_step, k),
        out_shape=jax.ShapeDtypeStruct((q_pad, k, d), table.dtype),
        grid_spec=pltpu.PrefetchScalarGridSpec(
            num_scalar_prefetch=1,                       # per-row starts -> SMEM
            grid=(grid,),
            in_specs=[
                # Full table in VMEM; constant block index => fetched once.
                pl.BlockSpec((n_total, d), lambda i, starts: (0, 0)),
            ],
            out_specs=pl.BlockSpec(
                (rows_per_step, k, d), lambda i, starts: (i, 0, 0)),
        ),
        compiler_params=pltpu.CompilerParams(
            dimension_semantics=("parallel",)),
    )(jnp.asarray(starts_padded), table)

    return out[:q] if q_pad != q else out


# -----------------------------------------------------------------------------
# Module forward: embeddings[distance_matrix] -> [Q, K, D]
# -----------------------------------------------------------------------------
def relative_positional_encoding(embeddings, query_length, key_length):
    """Pallas equivalent of RelativePositionalEncoding.forward (inputs unused)."""
    if (key_length - query_length) % 2:
        raise ValueError('Key_length should be query_length + 2 * memory_flange.')
    n, d = embeddings.shape
    flange = (key_length - query_length) // 2

    # Unclipped relative distances: dist[i, j] = starts_raw[i] + j.
    starts_raw = (MAX_SPAN - 1 - flange) - np.arange(query_length, dtype=np.int64)

    # Clipping (query + flange > MAX_SPAN) is identical to edge-replication
    # padding of the table: clamp(starts + arange(K), 0, N-1) == contiguous
    # slice of the padded table at offset starts + pad_lo.
    pad_lo = int(max(0, -int(starts_raw.min())))
    pad_hi = int(max(0, int(starts_raw.max()) + key_length - 1 - (n - 1)))
    if pad_lo or pad_hi:
        embeddings = jnp.pad(embeddings, ((pad_lo, pad_hi), (0, 0)), mode='edge')
    starts = (starts_raw + pad_lo).astype(np.int32)
    n_total = n + pad_lo + pad_hi

    # Host-side bounds check for the in-kernel dynamic slices.
    assert int(starts.min()) >= 0
    assert int(starts.max()) + key_length <= n_total

    return _slice_gather(embeddings, starts, query_length, key_length)


if __name__ == "__main__":
    # Small shapes consistent with the module: key = query + 2 * memory_flange.
    query_length, key_length, depth = 8, 16, 32
    initialization_std = 1.0

    # Deterministic parameter init (truncated normal at +/- 2 std), matching
    # torch.nn.init.trunc_normal_(std=1.0).
    key = jax.random.PRNGKey(0)
    embeddings = (
        jax.random.truncated_normal(
            key, -2.0, 2.0, (MAX_SPAN * 2 - 1, depth), dtype=jnp.float32)
        * initialization_std)

    # Dummy `inputs`; the module's forward does `del inputs` and never uses it.
    x = jax.random.normal(jax.random.PRNGKey(1), (2, 4, 16, 16), jnp.float32)
    del x

    # --- Primary (unclipped) case ---------------------------------------
    out = jax.block_until_ready(
        relative_positional_encoding(embeddings, query_length, key_length))
    dist = _compute_relative_distance_matrix(query_length, key_length)
    ref = jnp.take(embeddings, jnp.asarray(dist.reshape(-1)), axis=0).reshape(
        query_length, key_length, depth)
    assert out.shape == (query_length, key_length, depth)
    assert out.dtype == jnp.float32
    np.testing.assert_array_equal(np.asarray(out), np.asarray(ref))

    # --- Clipped case (query + flange > MAX_SPAN) ------------------------
    q2, k2 = 256, 264  # flange = 4, 256 + 4 > MAX_SPAN -> module clamps
    out2 = jax.block_until_ready(
        relative_positional_encoding(embeddings, q2, k2))
    dist2 = _compute_relative_distance_matrix(q2, k2)
    ref2 = jnp.take(embeddings, jnp.asarray(dist2.reshape(-1)), axis=0).reshape(
        q2, k2, depth)
    assert out2.shape == (q2, k2, depth)
    np.testing.assert_array_equal(np.asarray(out2), np.asarray(ref2))

    print("KERNEL_OK")
</pallas_src>

<mosaic_0001>
module attributes {stable_mosaic.version = 11 : i64} {
  func.func @kernel(%arg0: i32, %arg1: memref<8xi32, #tpu.memory_space<smem>>, %arg2: memref<509x32xf32, #tpu.memory_space<vmem>>, %arg3: memref<8x16x32xf32, #tpu.memory_space<vmem>>) attributes {dimension_semantics = [#tpu.dimension_semantics<parallel>], iteration_bounds = array<i64: 1>, scalar_prefetch = 1 : i64, scratch_operands = 0 : i64, tpu.core_type = #tpu.core_type<tc>, window_params = [{pipeline_mode = #tpu.pipeline_mode<synchronous>, transform_indices = @transform_0, window_bounds = array<i64: 509, 32>}, {transform_indices = @transform_1, window_bounds = array<i64: 8, 16, 32>}]} {
    %c8_i32 = arith.constant 8 : i32
    %0 = arith.muli %arg0, %c8_i32 : i32
    %c0_i32 = arith.constant 0 : i32
    %1 = arith.addi %0, %c0_i32 : i32
    %2 = arith.index_cast %1 : i32 to index
    %3 = memref.load %arg1[%2] : memref<8xi32, #tpu.memory_space<smem>>
    %4 = arith.index_cast %3 : i32 to index
    %c0 = arith.constant 0 : index
    %5 = vector.load %arg2[%4, %c0] : memref<509x32xf32, #tpu.memory_space<vmem>>, vector<16x32xf32>
    %6 = arith.index_cast %c0_i32 : i32 to index
    %c0_0 = arith.constant 0 : index
    %c0_1 = arith.constant 0 : index
    %7 = vector.load %arg3[%6, %c0_0, %c0_1] : memref<8x16x32xf32, #tpu.memory_space<vmem>>, vector<1x16x32xf32>
    %8 = vector.shape_cast %7 : vector<1x16x32xf32> to vector<16x32xf32>
    %9 = vector.shape_cast %5 : vector<16x32xf32> to vector<1x16x32xf32>
    tpu.vector_store %arg3[%6, %c0_0, %c0_1], %9 {strides = array<i32>} : memref<8x16x32xf32, #tpu.memory_space<vmem>>, vector<1x16x32xf32>,
    %c1_i32 = arith.constant 1 : i32
    %10 = arith.addi %0, %c1_i32 : i32
    %11 = arith.index_cast %10 : i32 to index
    %12 = memref.load %arg1[%11] : memref<8xi32, #tpu.memory_space<smem>>
    %13 = arith.index_cast %12 : i32 to index
    %c0_2 = arith.constant 0 : index
    %14 = vector.load %arg2[%13, %c0_2] : memref<509x32xf32, #tpu.memory_space<vmem>>, vector<16x32xf32>
    %15 = arith.index_cast %c1_i32 : i32 to index
    %c0_3 = arith.constant 0 : index
    %c0_4 = arith.constant 0 : index
    %16 = vector.load %arg3[%15, %c0_3, %c0_4] : memref<8x16x32xf32, #tpu.memory_space<vmem>>, vector<1x16x32xf32>
    %17 = vector.shape_cast %16 : vector<1x16x32xf32> to vector<16x32xf32>
    %18 = vector.shape_cast %14 : vector<16x32xf32> to vector<1x16x32xf32>
    tpu.vector_store %arg3[%15, %c0_3, %c0_4], %18 {strides = array<i32>} : memref<8x16x32xf32, #tpu.memory_space<vmem>>, vector<1x16x32xf32>,
    %c2_i32 = arith.constant 2 : i32
    %19 = arith.addi %0, %c2_i32 : i32
    %20 = arith.index_cast %19 : i32 to index
    %21 = memref.load %arg1[%20] : memref<8xi32, #tpu.memory_space<smem>>
    %22 = arith.index_cast %21 : i32 to index
    %c0_5 = arith.constant 0 : index
    %23 = vector.load %arg2[%22, %c0_5] : memref<509x32xf32, #tpu.memory_space<vmem>>, vector<16x32xf32>
    %24 = arith.index_cast %c2_i32 : i32 to index
    %c0_6 = arith.constant 0 : index
    %c0_7 = arith.constant 0 : index
    %25 = vector.load %arg3[%24, %c0_6, %c0_7] : memref<8x16x32xf32, #tpu.memory_space<vmem>>, vector<1x16x32xf32>
    %26 = vector.shape_cast %25 : vector<1x16x32xf32> to vector<16x32xf32>
    %27 = vector.shape_cast %23 : vector<16x32xf32> to vector<1x16x32xf32>
    tpu.vector_store %arg3[%24, %c0_6, %c0_7], %27 {strides = array<i32>} : memref<8x16x32xf32, #tpu.memory_space<vmem>>, vector<1x16x32xf32>,
    %c3_i32 = arith.constant 3 : i32
    %28 = arith.addi %0, %c3_i32 : i32
    %29 = arith.index_cast %28 : i32 to index
    %30 = memref.load %arg1[%29] : memref<8xi32, #tpu.memory_space<smem>>
    %31 = arith.index_cast %30 : i32 to index
    %c0_8 = arith.constant 0 : index
    %32 = vector.load %arg2[%31, %c0_8] : memref<509x32xf32, #tpu.memory_space<vmem>>, vector<16x32xf32>
    %33 = arith.index_cast %c3_i32 : i32 to index
    %c0_9 = arith.constant 0 : index
    %c0_10 = arith.constant 0 : index
    %34 = vector.load %arg3[%33, %c0_9, %c0_10] : memref<8x16x32xf32, #tpu.memory_space<vmem>>, vector<1x16x32xf32>
    %35 = vector.shape_cast %34 : vector<1x16x32xf32> to vector<16x32xf32>
    %36 = vector.shape_cast %32 : vector<16x32xf32> to vector<1x16x32xf32>
    tpu.vector_store %arg3[%33, %c0_9, %c0_10], %36 {strides = array<i32>} : memref<8x16x32xf32, #tpu.memory_space<vmem>>, vector<1x16x32xf32>,
    %c4_i32 = arith.constant 4 : i32
    %37 = arith.addi %0, %c4_i32 : i32
    %38 = arith.index_cast %37 : i32 to index
    %39 = memref.load %arg1[%38] : memref<8xi32, #tpu.memory_space<smem>>
    %40 = arith.index_cast %39 : i32 to index
    %c0_11 = arith.constant 0 : index
    %41 = vector.load %arg2[%40, %c0_11] : memref<509x32xf32, #tpu.memory_space<vmem>>, vector<16x32xf32>
    %42 = arith.index_cast %c4_i32 : i32 to index
    %c0_12 = arith.constant 0 : index
    %c0_13 = arith.constant 0 : index
    %43 = vector.load %arg3[%42, %c0_12, %c0_13] : memref<8x16x32xf32, #tpu.memory_space<vmem>>, vector<1x16x32xf32>
    %44 = vector.shape_cast %43 : vector<1x16x32xf32> to vector<16x32xf32>
    %45 = vector.shape_cast %41 : vector<16x32xf32> to vector<1x16x32xf32>
    tpu.vector_store %arg3[%42, %c0_12, %c0_13], %45 {strides = array<i32>} : memref<8x16x32xf32, #tpu.memory_space<vmem>>, vector<1x16x32xf32>,
    %c5_i32 = arith.constant 5 : i32
    %46 = arith.addi %0, %c5_i32 : i32
    %47 = arith.index_cast %46 : i32 to index
    %48 = memref.load %arg1[%47] : memref<8xi32, #tpu.memory_space<smem>>
    %49 = arith.index_cast %48 : i32 to index
    %c0_14 = arith.constant 0 : index
    %50 = vector.load %arg2[%49, %c0_14] : memref<509x32xf32, #tpu.memory_space<vmem>>, vector<16x32xf32>
    %51 = arith.index_cast %c5_i32 : i32 to index
    %c0_15 = arith.constant 0 : index
    %c0_16 = arith.constant 0 : index
    %52 = vector.load %arg3[%51, %c0_15, %c0_16] : memref<8x16x32xf32, #tpu.memory_space<vmem>>, vector<1x16x32xf32>
    %53 = vector.shape_cast %52 : vector<1x16x32xf32> to vector<16x32xf32>
    %54 = vector.shape_cast %50 : vector<16x32xf32> to vector<1x16x32xf32>
    tpu.vector_store %arg3[%51, %c0_15, %c0_16], %54 {strides = array<i32>} : memref<8x16x32xf32, #tpu.memory_space<vmem>>, vector<1x16x32xf32>,
    %c6_i32 = arith.constant 6 : i32
    %55 = arith.addi %0, %c6_i32 : i32
    %56 = arith.index_cast %55 : i32 to index
    %57 = memref.load %arg1[%56] : memref<8xi32, #tpu.memory_space<smem>>
    %58 = arith.index_cast %57 : i32 to index
    %c0_17 = arith.constant 0 : index
    %59 = vector.load %arg2[%58, %c0_17] : memref<509x32xf32, #tpu.memory_space<vmem>>, vector<16x32xf32>
    %60 = arith.index_cast %c6_i32 : i32 to index
    %c0_18 = arith.constant 0 : index
    %c0_19 = arith.constant 0 : index
    %61 = vector.load %arg3[%60, %c0_18, %c0_19] : memref<8x16x32xf32, #tpu.memory_space<vmem>>, vector<1x16x32xf32>
    %62 = vector.shape_cast %61 : vector<1x16x32xf32> to vector<16x32xf32>
    %63 = vector.shape_cast %59 : vector<16x32xf32> to vector<1x16x32xf32>
    tpu.vector_store %arg3[%60, %c0_18, %c0_19], %63 {strides = array<i32>} : memref<8x16x32xf32, #tpu.memory_space<vmem>>, vector<1x16x32xf32>,
    %c7_i32 = arith.constant 7 : i32
    %64 = arith.addi %0, %c7_i32 : i32
    %65 = arith.index_cast %64 : i32 to index
    %66 = memref.load %arg1[%65] : memref<8xi32, #tpu.memory_space<smem>>
    %67 = arith.index_cast %66 : i32 to index
    %c0_20 = arith.constant 0 : index
    %68 = vector.load %arg2[%67, %c0_20] : memref<509x32xf32, #tpu.memory_space<vmem>>, vector<16x32xf32>
    %69 = arith.index_cast %c7_i32 : i32 to index
    %c0_21 = arith.constant 0 : index
    %c0_22 = arith.constant 0 : index
    %70 = vector.load %arg3[%69, %c0_21, %c0_22] : memref<8x16x32xf32, #tpu.memory_space<vmem>>, vector<1x16x32xf32>
    %71 = vector.shape_cast %70 : vector<1x16x32xf32> to vector<16x32xf32>
    %72 = vector.shape_cast %68 : vector<16x32xf32> to vector<1x16x32xf32>
    tpu.vector_store %arg3[%69, %c0_21, %c0_22], %72 {strides = array<i32>} : memref<8x16x32xf32, #tpu.memory_space<vmem>>, vector<1x16x32xf32>,
    %c8_i32_23 = arith.constant 8 : i32
    return
  }
  func.func @transform_0(%arg0: i32, %arg1: memref<8xi32, #tpu.memory_space<smem>>) -> (i32, i32) {
    %c0_i32 = arith.constant 0 : i32
    %c0_i32_0 = arith.constant 0 : i32
    %c0_i32_1 = arith.constant 0 : i32
    return %c0_i32, %c0_i32_0 : i32, i32
  }
  func.func @transform_1(%arg0: i32, %arg1: memref<8xi32, #tpu.memory_space<smem>>) -> (i32, i32, i32) {
    %c0_i32 = arith.constant 0 : i32
    %c0_i32_0 = arith.constant 0 : i32
    %c0_i32_1 = arith.constant 0 : i32
    return %arg0, %c0_i32, %c0_i32_0 : i32, i32, i32
  }
}

</mosaic_0001>

<llo_original>
// kernel: tpu_custom_call.1
$region0: #{tpu_custom_call.1}
  #allocation0 [shape = 'u32[]', space=smem, size = 0x4, offset = 0x4, fixed_abs, tag = 'smem constant byte address 0x4 - core index']
  #allocation1 [shape = 'u32[144,128]{1,0:T(1,128)}', space=vmem, size = 0x12000, scoped, tag = 'internal scratch']
  #allocation2 [shape = 's32[1]{0}', space=sflag, size = 0x4, scoped, tag = 'scoped memory for tpu_custom_call.1']
  #allocation3 [shape = 'u8[512]{0}', space=smem, size = 0x200, scoped, tag = 'prefetched SMEM operand 0']
  %s0 = inlined_call_operand.vmem [shape: s32[8], index: 0, kind: input, shape index: {}]
  %s1 = inlined_call_operand.vmem [shape: f32[509,32], index: 1, kind: input, shape index: {}]
  %s2 = inlined_call_operand.hbm [shape: f32[8,16,32], index: 2, kind: output, shape index: {}]
  %s3 = sld [smem:[#allocation0]]
  $region14: #{tpu_custom_call.1} parent=0
    _
  %s5 = ssub.s32 1, %s3
  %s6 = scalar_select 0, %s5, %s3
  %s7 = sshll.u32 %s0, 4
  %s8 = int_to_ptr.vmem [resolvable:$true] %s7
  %10 = dma.vmem_to_smem %s8, 16, [#allocation3], [#allocation2]
  %11 = dma.done [#allocation2], 16
  %12 = sfence
  $region1: #{tpu_custom_call.1} parent=0
    #allocation4 [shape = 'u8[65536]{0}', space=vmem, size = 0x10000, scoped, tag = 'output window, operand 0, single buffered']
    #allocation5 [shape = 's32[1]{0}', space=sflag, size = 0x4, scoped, tag = 'scoped memory for tpu_custom_call.1']
    %13 = vsyncpa [#allocation5], 0
    // Predicated region
    $region2: #{tpu_custom_call.1} parent=1 // pred_check
      _
    $region3: #{tpu_custom_call.1} parent=1 // pred_check_branch
      %15 = sbr.rel (0) target = $region5
    $region4: #{tpu_custom_call.1} parent=1 // pred_region
      _
    $region5: #{tpu_custom_call.1} parent=1 // pred_fallthru
      _
    %s16 = smul.u32 0, 8
    %s17 = sld [smem:[#allocation3 + %s16]]
    %s18 = scalar_lea.vmem %s1, %s17
    %v19 = vld [vmem:[%s18] sm:$0xff]
    %v20 = vld [vmem:[%s18 + $0x8] sm:$0xff]
    %vm21 = vcmask 261120
    %22 = vst.msk [vmem:[#allocation4] sm:$0xff] %vm21, %v19
    %23 = vst.msk [vmem:[#allocation4 + $0x8] sm:$0xff] %vm21, %v20
    %s24 = sadd.s32 %s16, 1
    %s25 = sld [smem:[#allocation3 + %s24]]
    %s26 = scalar_lea.vmem %s1, %s25
    %v27 = vld [vmem:[%s26] sm:$0xff]
    %v28 = vld [vmem:[%s26 + $0x8] sm:$0xff]
    %s29 = scalar_lea.vmem [#allocation4], 16
    %30 = vst.msk [vmem:[%s29] sm:$0xff] %vm21, %v27
    %31 = vst.msk [vmem:[%s29 + $0x8] sm:$0xff] %vm21, %v28
    %s32 = sadd.s32 %s16, 2
    %s33 = sld [smem:[#allocation3 + %s32]]
    %s34 = scalar_lea.vmem %s1, %s33
    %v35 = vld [vmem:[%s34] sm:$0xff]
    %v36 = vld [vmem:[%s34 + $0x8] sm:$0xff]
    %s37 = scalar_lea.vmem [#allocation4], 32
    %38 = vst.msk [vmem:[%s37] sm:$0xff] %vm21, %v35
    %39 = vst.msk [vmem:[%s37 + $0x8] sm:$0xff] %vm21, %v36
    %s40 = sadd.s32 %s16, 3
    %s41 = sld [smem:[#allocation3 + %s40]]
    %s42 = scalar_lea.vmem %s1, %s41
    %v43 = vld [vmem:[%s42] sm:$0xff]
    %v44 = vld [vmem:[%s42 + $0x8] sm:$0xff]
    %s45 = scalar_lea.vmem [#allocation4], 48
    %46 = vst.msk [vmem:[%s45] sm:$0xff] %vm21, %v43
    %47 = vst.msk [vmem:[%s45 + $0x8] sm:$0xff] %vm21, %v44
    %s48 = sadd.s32 %s16, 4
    %s49 = sld [smem:[#allocation3 + %s48]]
    %s50 = scalar_lea.vmem %s1, %s49
    %v51 = vld [vmem:[%s50] sm:$0xff]
    %v52 = vld [vmem:[%s50 + $0x8] sm:$0xff]
    %s53 = scalar_lea.vmem [#allocation4], 64
    %54 = vst.msk [vmem:[%s53] sm:$0xff] %vm21, %v51
    %55 = vst.msk [vmem:[%s53 + $0x8] sm:$0xff] %vm21, %v52
    %s56 = sadd.s32 %s16, 5
    %s57 = sld [smem:[#allocation3 + %s56]]
    %s58 = scalar_lea.vmem %s1, %s57
    %v59 = vld [vmem:[%s58] sm:$0xff]
    %v60 = vld [vmem:[%s58 + $0x8] sm:$0xff]
    %s61 = scalar_lea.vmem [#allocation4], 80
    %62 = vst.msk [vmem:[%s61] sm:$0xff] %vm21, %v59
    %63 = vst.msk [vmem:[%s61 + $0x8] sm:$0xff] %vm21, %v60
    %s64 = sadd.s32 %s16, 6
    %s65 = sld [smem:[#allocation3 + %s64]]
    %s66 = scalar_lea.vmem %s1, %s65
    %v67 = vld [vmem:[%s66] sm:$0xff]
    %v68 = vld [vmem:[%s66 + $0x8] sm:$0xff]
    %s69 = scalar_lea.vmem [#allocation4], 96
    %70 = vst.msk [vmem:[%s69] sm:$0xff] %vm21, %v67
    %71 = vst.msk [vmem:[%s69 + $0x8] sm:$0xff] %vm21, %v68
    %s72 = sadd.s32 %s16, 7
    %s73 = sld [smem:[#allocation3 + %s72]]
    %s74 = scalar_lea.vmem %s1, %s73
    %v75 = vld [vmem:[%s74] sm:$0xff]
    %v76 = vld [vmem:[%s74 + $0x8] sm:$0xff]
    %s77 = scalar_lea.vmem [#allocation4], 112
    %78 = vst.msk [vmem:[%s77] sm:$0xff] %vm21, %v75
    %79 = vst.msk [vmem:[%s77 + $0x8] sm:$0xff] %vm21, %v76
    // Predicated region
    $region6: #{tpu_custom_call.1} parent=1 // pred_check
      _
    $region7: #{tpu_custom_call.1} parent=1 // pred_check_branch
      %81 = sbr.rel (0) target = $region9
    $region8: #{tpu_custom_call.1} parent=1 // pred_region
      %s83 = ssub.s32 2048, 2048
      %84 = vsyncadd [#allocation5], %s83
      %s85 = sshll.u32 [#allocation4], 4
      %s86 = int_to_ptr.vmem [resolvable:$true] %s85
      %91 = dma.vmem_to_hbm [thread:$0]  %s86, 2048, %s2, [#allocation5], 128, 128, 8
    $region9: #{tpu_custom_call.1} parent=1 // pred_fallthru
      _
    // Predicated region
    $region10: #{tpu_custom_call.1} parent=1 // pred_check
      _
    $region11: #{tpu_custom_call.1} parent=1 // pred_check_branch
      %93 = sbr.rel (0) target = $region13
    $region12: #{tpu_custom_call.1} parent=1 // pred_region
      %94 = dma.done [#allocation5], 2048
    $region13: #{tpu_custom_call.1} parent=1 // pred_fallthru
      _
    %95 = vsyncpa [#allocation5], 1

</llo_original>
